<compile_context>
chip_gen: v6e
topology: v6e:2x2x1
jax: 0.10.0
libtpu: 0.0.40
codegen_flags: <defaults>
</compile_context>

<pallas_src>
import functools

import jax
import jax.numpy as jnp
from jax import lax
from jax.experimental import pallas as pl
from jax.experimental.pallas import tpu as pltpu


def _softplus(x):
    # PyTorch-style numerically stable softplus (threshold 20).
    return jnp.where(x > 20.0, x, jnp.log1p(jnp.exp(jnp.minimum(x, 20.0))))


def _elu(x):
    return jnp.where(x > 0.0, x, jnp.exp(jnp.minimum(x, 0.0)) - 1.0)


def student_t_kernel(x_ref, w1_ref, b1_ref, w2t_ref, b2t_ref, out_ref):
    """One batch tile: x (TB, F) -> out (2, TB) with row0=loc, row1=scale."""
    x = x_ref[...]                                            # (TB, F)

    # Hidden layer: Linear + ELU (MXU matmul, f32 accumulate).
    h = jnp.dot(x, w1_ref[...], preferred_element_type=jnp.float32) + b1_ref[...]
    h = _elu(h)                                               # (TB, H)

    # Head layer computed transposed: (2, H) . (TB, H)^T -> (2, TB).
    ls_t = lax.dot_general(
        w2t_ref[...], h,
        dimension_numbers=(((1,), (1,)), ((), ())),
        preferred_element_type=jnp.float32,
    ) + b2t_ref[...]                                          # (2, TB)

    # Row 0 -> loc (clamp only); row 1 -> scale (softplus + clamp).
    row = lax.broadcasted_iota(jnp.int32, ls_t.shape, 0)
    loc_branch = jnp.clip(ls_t, -1000000.0, 1000000.0)
    scale_branch = jnp.clip(_softplus(ls_t), 0.001, 1000000.0)
    out_ref[...] = jnp.where(row == 0, loc_branch, scale_branch)


def student_t_forward(x, params, *, block_batch=1024):
    """StudentTNet forward. Returns (df, loc, scale), each shape (B,)."""
    w1, b1, w2t, b2t, dfu = params
    B, F = x.shape
    H = w1.shape[1]

    assert block_batch % 128 == 0
    # Lane-dense output tile needs TB to be a multiple of 128.
    tb = min(block_batch, pl.cdiv(B, 128) * 128)
    b_pad = pl.cdiv(B, tb) * tb
    if b_pad != B:
        x = jnp.pad(x, ((0, b_pad - B), (0, 0)))
    n_blocks = b_pad // tb

    cost = pl.CostEstimate(
        flops=int(2 * b_pad * (F * H + H * 2)),
        transcendentals=int(b_pad * (H + 2)),
        bytes_accessed=int(4 * (b_pad * F + 2 * b_pad + F * H + H + 2 * H + 2)),
    )

    out = pl.pallas_call(
        student_t_kernel,
        out_shape=jax.ShapeDtypeStruct((2, b_pad), jnp.float32),
        grid=(n_blocks,),
        in_specs=[
            pl.BlockSpec((tb, F), lambda i: (i, 0)),      # streaming batch tiles
            pl.BlockSpec((F, H), lambda i: (0, 0)),       # resident weights
            pl.BlockSpec((1, H), lambda i: (0, 0)),
            pl.BlockSpec((2, H), lambda i: (0, 0)),
            pl.BlockSpec((2, 1), lambda i: (0, 0)),
        ],
        out_specs=pl.BlockSpec((2, tb), lambda i: (0, i)),
        compiler_params=pltpu.CompilerParams(
            dimension_semantics=("parallel",),            # shard batch tiles across TCs (v7x)
            vmem_limit_bytes=32 * 1024 * 1024,            # safe on v7x's 64 MiB VMEM
        ),
        cost_estimate=cost,
    )(x, w1, b1, w2t, b2t)

    loc = out[0, :B]
    scale = out[1, :B]
    # df is batch-invariant: one scalar softplus, broadcast at the consumer.
    df = jnp.broadcast_to(jax.nn.softplus(dfu) + 1.0, loc.shape)
    return df, loc, scale


def init_params(key, sizes):
    """Deterministic init. sizes is the StudentTNet `sizes` arg (fc = sizes + [2])."""
    fc_sizes = list(sizes) + [2]
    assert len(fc_sizes) == 3, "this script instantiates a 2-linear-layer fc"
    k1, k2, k3, k4 = jax.random.split(key, 4)

    in1, out1 = fc_sizes[0], fc_sizes[1]
    in2, out2 = fc_sizes[1], fc_sizes[2]

    # First layer stored as (in, out) so the kernel computes x @ W1 + b1.
    w1 = jax.random.normal(k1, (in1, out1), jnp.float32) * 0.1
    b1 = jax.random.normal(k2, (1, out1), jnp.float32) * 0.01
    # Head layer stored transposed: (2, hidden) / (2, 1) -> lane-dense (2, TB) output.
    w2t = jax.random.normal(k3, (out2, in2), jnp.float32) * 0.1
    b2t = jax.random.normal(k4, (out2, 1), jnp.float32) * 0.01
    # nn.Parameter(torch.tensor(0.0))
    dfu = jnp.array(0.0, jnp.float32)
    return (w1, b1, w2t, b2t, dfu)


def reference_forward(x, params):
    """Pure-JAX reference of the PyTorch forward, for a sanity check."""
    w1, b1, w2t, b2t, dfu = params
    h = jax.nn.elu(x @ w1 + b1)
    ls = h @ w2t.T + b2t.T                     # (B, 2)
    loc = jnp.clip(ls[..., 0], -1e6, 1e6)
    scale = jnp.clip(jax.nn.softplus(ls[..., 1]), 1e-3, 1e6)
    df = jnp.broadcast_to(jax.nn.softplus(dfu) + 1.0, loc.shape)
    return df, loc, scale


if __name__ == "__main__":
    key = jax.random.PRNGKey(0)
    kx, kp = jax.random.split(key)

    sizes = [16, 32]          # StudentTNet(sizes); fc = [16, 32, 2]
    B = 512
    x = jax.random.normal(kx, (B, sizes[0]), jnp.float32)
    params = init_params(kp, sizes)

    # block_batch=128 at this small demo shape -> 4 pipelined grid steps.
    fwd = functools.partial(student_t_forward, block_batch=128)
    df, loc, scale = fwd(x, params)
    jax.block_until_ready((df, loc, scale))

    # correctness check against pure-JAX reference
    df_r, loc_r, scale_r = reference_forward(x, params)
    assert df.shape == (B,) and loc.shape == (B,) and scale.shape == (B,)
    assert jnp.allclose(df, df_r, atol=3e-5, rtol=1e-5), "df mismatch"
    assert jnp.allclose(loc, loc_r, atol=3e-5, rtol=1e-5), "loc mismatch"
    assert jnp.allclose(scale, scale_r, atol=3e-5, rtol=1e-5), "scale mismatch"

    print("KERNEL_OK")
</pallas_src>

<mosaic_0001>
module attributes {stable_mosaic.version = 11 : i64} {
  func.func @student_t_kernel(%arg0: i32, %arg1: memref<128x16xf32, #tpu.memory_space<vmem>>, %arg2: memref<16x32xf32, #tpu.memory_space<vmem>>, %arg3: memref<1x32xf32, #tpu.memory_space<vmem>>, %arg4: memref<2x32xf32, #tpu.memory_space<vmem>>, %arg5: memref<2x1xf32, #tpu.memory_space<vmem>>, %arg6: memref<2x128xf32, #tpu.memory_space<vmem>>) attributes {dimension_semantics = [#tpu.dimension_semantics<parallel>], iteration_bounds = array<i64: 4>, scalar_prefetch = 0 : i64, scratch_operands = 0 : i64, tpu.core_type = #tpu.core_type<tc>, window_params = [{transform_indices = @transform_0, window_bounds = array<i64: 128, 16>}, {pipeline_mode = #tpu.pipeline_mode<synchronous>, transform_indices = @transform_1, window_bounds = array<i64: 16, 32>}, {pipeline_mode = #tpu.pipeline_mode<synchronous>, transform_indices = @transform_2, window_bounds = array<i64: 1, 32>}, {pipeline_mode = #tpu.pipeline_mode<synchronous>, transform_indices = @transform_3, window_bounds = array<i64: 2, 32>}, {pipeline_mode = #tpu.pipeline_mode<synchronous>, transform_indices = @transform_4, window_bounds = array<i64: 2, 1>}, {transform_indices = @transform_5, window_bounds = array<i64: 2, 128>}]} {
    %c0 = arith.constant 0 : index
    %c0_0 = arith.constant 0 : index
    %0 = vector.load %arg1[%c0, %c0_0] : memref<128x16xf32, #tpu.memory_space<vmem>>, vector<128x16xf32>
    %c0_1 = arith.constant 0 : index
    %c0_2 = arith.constant 0 : index
    %1 = vector.load %arg2[%c0_1, %c0_2] : memref<16x32xf32, #tpu.memory_space<vmem>>, vector<16x32xf32>
    %cst = arith.constant dense<0.000000e+00> : vector<128x32xf32>
    %2 = tpu.matmul %0, %1, %cst {dimension_numbers = #tpu.dot_dimension_numbers<[1], [0], [0], [1], [0, 0, 1, 1], [], []>} : vector<128x16xf32>, vector<16x32xf32>, vector<128x32xf32> -> vector<128x32xf32>
    %c0_3 = arith.constant 0 : index
    %c0_4 = arith.constant 0 : index
    %3 = vector.load %arg3[%c0_3, %c0_4] : memref<1x32xf32, #tpu.memory_space<vmem>>, vector<1x32xf32>
    %4 = vector.broadcast %3 : vector<1x32xf32> to vector<128x32xf32>
    %5 = arith.addf %2, %4 : vector<128x32xf32>
    %cst_5 = arith.constant 0.000000e+00 : f32
    %6 = vector.broadcast %cst_5 : f32 to vector<128x32xf32>
    %7 = arith.cmpf ogt, %5, %6 : vector<128x32xf32>
    %cst_6 = arith.constant 0.000000e+00 : f32
    %8 = vector.broadcast %cst_6 : f32 to vector<128x32xf32>
    %9 = arith.minimumf %5, %8 : vector<128x32xf32>
    %10 = math.exp %9 : vector<128x32xf32>
    %cst_7 = arith.constant 1.000000e+00 : f32
    %11 = vector.broadcast %cst_7 : f32 to vector<128x32xf32>
    %12 = arith.subf %10, %11 : vector<128x32xf32>
    %13 = arith.select %7, %5, %12 : vector<128x32xi1>, vector<128x32xf32>
    %c0_8 = arith.constant 0 : index
    %c0_9 = arith.constant 0 : index
    %14 = vector.load %arg4[%c0_8, %c0_9] : memref<2x32xf32, #tpu.memory_space<vmem>>, vector<2x32xf32>
    %cst_10 = arith.constant dense<0.000000e+00> : vector<2x128xf32>
    %15 = tpu.matmul %14, %13, %cst_10 {dimension_numbers = #tpu.dot_dimension_numbers<[1], [1], [0], [0], [0, 0, 1, 0], [], []>} : vector<2x32xf32>, vector<128x32xf32>, vector<2x128xf32> -> vector<2x128xf32>
    %c0_11 = arith.constant 0 : index
    %c0_12 = arith.constant 0 : index
    %16 = vector.load %arg5[%c0_11, %c0_12] : memref<2x1xf32, #tpu.memory_space<vmem>>, vector<2x1xf32>
    %17 = vector.broadcast %16 : vector<2x1xf32> to vector<2x128xf32>
    %18 = arith.addf %15, %17 : vector<2x128xf32>
    %19 = tpu.iota {dimensions = array<i32: 0>} : vector<2x128xi32>
    %cst_13 = arith.constant -1.000000e+06 : f32
    %cst_14 = arith.constant 1.000000e+06 : f32
    %20 = vector.broadcast %cst_13 : f32 to vector<2x128xf32>
    %21 = arith.maximumf %20, %18 : vector<2x128xf32>
    %22 = vector.broadcast %cst_14 : f32 to vector<2x128xf32>
    %23 = arith.minimumf %22, %21 : vector<2x128xf32>
    %cst_15 = arith.constant 2.000000e+01 : f32
    %24 = vector.broadcast %cst_15 : f32 to vector<2x128xf32>
    %25 = arith.cmpf ogt, %18, %24 : vector<2x128xf32>
    %cst_16 = arith.constant 2.000000e+01 : f32
    %26 = vector.broadcast %cst_16 : f32 to vector<2x128xf32>
    %27 = arith.minimumf %18, %26 : vector<2x128xf32>
    %28 = math.exp %27 : vector<2x128xf32>
    %29 = math.log1p %28 : vector<2x128xf32>
    %30 = arith.select %25, %18, %29 : vector<2x128xi1>, vector<2x128xf32>
    %cst_17 = arith.constant 1.000000e-03 : f32
    %cst_18 = arith.constant 1.000000e+06 : f32
    %31 = vector.broadcast %cst_17 : f32 to vector<2x128xf32>
    %32 = arith.maximumf %31, %30 : vector<2x128xf32>
    %33 = vector.broadcast %cst_18 : f32 to vector<2x128xf32>
    %34 = arith.minimumf %33, %32 : vector<2x128xf32>
    %c0_i32 = arith.constant 0 : i32
    %35 = vector.broadcast %c0_i32 : i32 to vector<2x128xi32>
    %36 = arith.cmpi eq, %19, %35 : vector<2x128xi32>
    %37 = arith.select %36, %23, %34 : vector<2x128xi1>, vector<2x128xf32>
    %c0_19 = arith.constant 0 : index
    %c0_20 = arith.constant 0 : index
    %38 = vector.load %arg6[%c0_19, %c0_20] : memref<2x128xf32, #tpu.memory_space<vmem>>, vector<2x128xf32>
    tpu.vector_store %arg6[%c0_19, %c0_20], %37 {strides = array<i32>} : memref<2x128xf32, #tpu.memory_space<vmem>>, vector<2x128xf32>,
    return
  }
  func.func @transform_0(%arg0: i32) -> (i32, i32) {
    %c0_i32 = arith.constant 0 : i32
    %c0_i32_0 = arith.constant 0 : i32
    return %arg0, %c0_i32 : i32, i32
  }
  func.func @transform_1(%arg0: i32) -> (i32, i32) {
    %c0_i32 = arith.constant 0 : i32
    %c0_i32_0 = arith.constant 0 : i32
    %c0_i32_1 = arith.constant 0 : i32
    return %c0_i32, %c0_i32_0 : i32, i32
  }
  func.func @transform_2(%arg0: i32) -> (i32, i32) {
    %c0_i32 = arith.constant 0 : i32
    %c0_i32_0 = arith.constant 0 : i32
    %c0_i32_1 = arith.constant 0 : i32
    return %c0_i32, %c0_i32_0 : i32, i32
  }
  func.func @transform_3(%arg0: i32) -> (i32, i32) {
    %c0_i32 = arith.constant 0 : i32
    %c0_i32_0 = arith.constant 0 : i32
    %c0_i32_1 = arith.constant 0 : i32
    return %c0_i32, %c0_i32_0 : i32, i32
  }
  func.func @transform_4(%arg0: i32) -> (i32, i32) {
    %c0_i32 = arith.constant 0 : i32
    %c0_i32_0 = arith.constant 0 : i32
    %c0_i32_1 = arith.constant 0 : i32
    return %c0_i32, %c0_i32_0 : i32, i32
  }
  func.func @transform_5(%arg0: i32) -> (i32, i32) {
    %c0_i32 = arith.constant 0 : i32
    %c0_i32_0 = arith.constant 0 : i32
    return %c0_i32, %arg0 : i32, i32
  }
}

</mosaic_0001>

<llo_original>
// kernel: tpu_custom_call.1
$region0: #{tpu_custom_call.1}
  #allocation0 [shape = 'u32[]', space=smem, size = 0x4, offset = 0x4, fixed_abs, tag = 'smem constant byte address 0x4 - core index']
  #allocation1 [shape = 'u32[144,128]{1,0:T(1,128)}', space=vmem, size = 0x12000, scoped, tag = 'internal scratch']
  %s0 = inlined_call_operand.vmem [shape: f32[512,16], index: 0, kind: input, shape index: {}]
  %s1 = inlined_call_operand.vmem [shape: f32[16,32], index: 1, kind: input, shape index: {}]
  %s2 = inlined_call_operand.vmem [shape: f32[1,32], index: 2, kind: input, shape index: {}]
  %s3 = inlined_call_operand.vmem [shape: f32[2,32], index: 3, kind: input, shape index: {}]
  %s4 = inlined_call_operand.vmem [shape: f32[2,1], index: 4, kind: input, shape index: {}]
  %s5 = inlined_call_operand.hbm [shape: f32[2,512], index: 5, kind: output, shape index: {}]
  %s6 = sld [smem:[#allocation0]]
  $region53: #{tpu_custom_call.1} parent=0
    _
  %s8 = ssub.s32 1, %s6
  %s9 = scalar_select 0, %s8, %s6
  $region1: #{tpu_custom_call.1} parent=0
    #allocation2 [shape = 'u8[2048]{0}', space=vmem, size = 0x800, scoped, tag = 'output window, operand 0']
    #allocation3 [shape = 's32[2]{0}', space=sflag, size = 0x8, scoped, tag = 'scoped memory for tpu_custom_call.1']
    %10 = vsyncpa [#allocation3], 0
    %s11 = scalar_lea.sflag [#allocation3], 1
    %12 = vsyncpa %s11, 0
    loop: start=0, step=1, limit=6
    $region2: #{tpu_custom_call.1} parent=1 // loop_pre_header
      _
    $region3: #{tpu_custom_call.1} parent=1 // loop_header
      %s14 = sphi 0, %s18
      %p15 = scmp.ge.s32.totalorder %s14, 6
      %s24 = sphi 0, %s26
      %s27 = sphi 0, %s24
      %s28 = sphi 0, %s27
      %s44 = sphi 0, %s28
      %s48 = sphi 0, %s48
      %s50 = sphi 0, %s48
      %s51 = sphi 0, %s50
      %s65 = sphi 0, %s51
      %s69 = sphi 0, %s69
      %s71 = sphi 0, %s69
      %s72 = sphi 0, %s71
      %s86 = sphi 0, %s72
      %s90 = sphi 0, %s90
      %s92 = sphi 0, %s90
      %s93 = sphi 0, %s92
      %s107 = sphi 0, %s93
      %s111 = sphi 0, %s111
      %s113 = sphi 0, %s111
      %s114 = sphi 0, %s113
      %s128 = sphi 0, %s114
      %s134 = sphi 0, %s136
      %s137 = sphi 0, %s134
      %s138 = sphi 0, %s137
      %s154 = sphi 0, %s138
    $region4: #{tpu_custom_call.1} parent=1 // loop_header_branch
      %17 = sbr.rel (%p15) target = $region8
    $region5: #{tpu_custom_call.1} parent=1 // loop_body
      %s19 = ssub.s32 %s14, 1
      %s20 = ssub.s32 %s14, 2
      %s21 = sadd.s32 %s14, 1
      %s22 = ssub.s32 %s14, %s21
      %p23 = scmp.eq.s32.totalorder %s22, 0
      %s25 = sadd.s32 %s24, 1
      %s26 = scalar_select %p23, %s24, %s25
      %p29 = pneg %p23
      %p30 = scmp.eq.s32.totalorder %s14, 3
      %p31 = por %p29, %p30
      %p32 = scmp.ne.s32.totalorder %s24, %s27
      %p33 = scmp.eq.s32.totalorder %s14, 0
      %p34 = por %p32, %p33
      %p35 = scmp.ne.s32.totalorder %s24, %s27
      %p36 = scmp.eq.s32.totalorder %s19, 3
      %p37 = por %p35, %p36
      %p38 = scmp.ne.s32.totalorder %s27, %s28
      %p39 = scmp.eq.s32.totalorder %s19, 0
      %p40 = por %p38, %p39
      %p41 = scmp.ne.s32.totalorder %s27, %s28
      %p42 = scmp.eq.s32.totalorder %s20, 3
      %p43 = por %p41, %p42
      %p45 = scmp.ne.s32.totalorder %s28, %s44
      %p46 = scmp.eq.s32.totalorder %s20, 0
      %p47 = por %p45, %p46
      %s49 = sadd.s32 %s48, 1
      %p52 = scmp.eq.s32.totalorder %s14, 3
      %p53 = scmp.ne.s32.totalorder %s48, %s50
      %p54 = scmp.eq.s32.totalorder %s14, 0
      %p55 = por %p53, %p54
      %p56 = scmp.ne.s32.totalorder %s48, %s50
      %p57 = scmp.eq.s32.totalorder %s19, 3
      %p58 = por %p56, %p57
      %p59 = scmp.ne.s32.totalorder %s50, %s51
      %p60 = scmp.eq.s32.totalorder %s19, 0
      %p61 = por %p59, %p60
      %p62 = scmp.ne.s32.totalorder %s50, %s51
      %p63 = scmp.eq.s32.totalorder %s20, 3
      %p64 = por %p62, %p63
      %p66 = scmp.ne.s32.totalorder %s51, %s65
      %p67 = scmp.eq.s32.totalorder %s20, 0
      %p68 = por %p66, %p67
      %s70 = sadd.s32 %s69, 1
      %p73 = scmp.eq.s32.totalorder %s14, 3
      %p74 = scmp.ne.s32.totalorder %s69, %s71
      %p75 = scmp.eq.s32.totalorder %s14, 0
      %p76 = por %p74, %p75
      %p77 = scmp.ne.s32.totalorder %s69, %s71
      %p78 = scmp.eq.s32.totalorder %s19, 3
      %p79 = por %p77, %p78
      %p80 = scmp.ne.s32.totalorder %s71, %s72
      %p81 = scmp.eq.s32.totalorder %s19, 0
      %p82 = por %p80, %p81
      %p83 = scmp.ne.s32.totalorder %s71, %s72
      %p84 = scmp.eq.s32.totalorder %s20, 3
      %p85 = por %p83, %p84
      %p87 = scmp.ne.s32.totalorder %s72, %s86
      %p88 = scmp.eq.s32.totalorder %s20, 0
      %p89 = por %p87, %p88
      %s91 = sadd.s32 %s90, 1
      %p94 = scmp.eq.s32.totalorder %s14, 3
      %p95 = scmp.ne.s32.totalorder %s90, %s92
      %p96 = scmp.eq.s32.totalorder %s14, 0
      %p97 = por %p95, %p96
      %p98 = scmp.ne.s32.totalorder %s90, %s92
      %p99 = scmp.eq.s32.totalorder %s19, 3
      %p100 = por %p98, %p99
      %p101 = scmp.ne.s32.totalorder %s92, %s93
      %p102 = scmp.eq.s32.totalorder %s19, 0
      %p103 = por %p101, %p102
      %p104 = scmp.ne.s32.totalorder %s92, %s93
      %p105 = scmp.eq.s32.totalorder %s20, 3
      %p106 = por %p104, %p105
      %p108 = scmp.ne.s32.totalorder %s93, %s107
      %p109 = scmp.eq.s32.totalorder %s20, 0
      %p110 = por %p108, %p109
      %s112 = sadd.s32 %s111, 1
      %p115 = scmp.eq.s32.totalorder %s14, 3
      %p116 = scmp.ne.s32.totalorder %s111, %s113
      %p117 = scmp.eq.s32.totalorder %s14, 0
      %p118 = por %p116, %p117
      %p119 = scmp.ne.s32.totalorder %s111, %s113
      %p120 = scmp.eq.s32.totalorder %s19, 3
      %p121 = por %p119, %p120
      %p122 = scmp.ne.s32.totalorder %s113, %s114
      %p123 = scmp.eq.s32.totalorder %s19, 0
      %p124 = por %p122, %p123
      %p125 = scmp.ne.s32.totalorder %s113, %s114
      %p126 = scmp.eq.s32.totalorder %s20, 3
      %p127 = por %p125, %p126
      %p129 = scmp.ne.s32.totalorder %s114, %s128
      %p130 = scmp.eq.s32.totalorder %s20, 0
      %p131 = por %p129, %p130
      %s132 = ssub.s32 %s14, %s21
      %p133 = scmp.eq.s32.totalorder %s132, 0
      %s135 = sadd.s32 %s134, 1
      %s136 = scalar_select %p133, %s134, %s135
      %p139 = pneg %p133
      %p140 = scmp.eq.s32.totalorder %s14, 3
      %p141 = por %p139, %p140
      %p142 = scmp.ne.s32.totalorder %s134, %s137
      %p143 = scmp.eq.s32.totalorder %s14, 0
      %p144 = por %p142, %p143
      %p145 = scmp.ne.s32.totalorder %s134, %s137
      %p146 = scmp.eq.s32.totalorder %s19, 3
      %p147 = por %p145, %p146
      %p148 = scmp.ne.s32.totalorder %s137, %s138
      %p149 = scmp.eq.s32.totalorder %s19, 0
      %p150 = por %p148, %p149
      %p151 = scmp.ne.s32.totalorder %s137, %s138
      %p152 = scmp.eq.s32.totalorder %s20, 3
      %p153 = por %p151, %p152
      %p155 = scmp.ne.s32.totalorder %s138, %s154
      %p156 = scmp.eq.s32.totalorder %s20, 0
      %p157 = por %p155, %p156
      %p158 = scmp.le.s32.totalorder 1, %s14
      %p159 = scmp.lt.s32.totalorder %s14, 5
      %p160 = pnand %p158, %p159
      %p161 = pneg %p160
      // Predicated region
      $region9: #{tpu_custom_call.1} parent=5 // pred_check
        _
      $region10: #{tpu_custom_call.1} parent=5 // pred_check_branch
        %163 = sbr.rel (%p160) target = $region12
      $region11: #{tpu_custom_call.1} parent=5 // pred_region
        %s164 = ssub.s32 %s14, 1
        // Predicated region
        $region13: #{tpu_custom_call.1} parent=11 // pred_check
          %p165 = pneg %p61
        $region14: #{tpu_custom_call.1} parent=11 // pred_check_branch
          %167 = sbr.rel (%p165) target = $region16
        $region15: #{tpu_custom_call.1} parent=11 // pred_region
          _
        $region16: #{tpu_custom_call.1} parent=11 // pred_fallthru
          _
        // Predicated region
        $region17: #{tpu_custom_call.1} parent=11 // pred_check
          %p168 = pneg %p82
        $region18: #{tpu_custom_call.1} parent=11 // pred_check_branch
          %170 = sbr.rel (%p168) target = $region20
        $region19: #{tpu_custom_call.1} parent=11 // pred_region
          _
        $region20: #{tpu_custom_call.1} parent=11 // pred_fallthru
          _
        // Predicated region
        $region21: #{tpu_custom_call.1} parent=11 // pred_check
          %p171 = pneg %p103
        $region22: #{tpu_custom_call.1} parent=11 // pred_check_branch
          %173 = sbr.rel (%p171) target = $region24
        $region23: #{tpu_custom_call.1} parent=11 // pred_region
          _
        $region24: #{tpu_custom_call.1} parent=11 // pred_fallthru
          _
        // Predicated region
        $region25: #{tpu_custom_call.1} parent=11 // pred_check
          %p174 = pneg %p124
        $region26: #{tpu_custom_call.1} parent=11 // pred_check_branch
          %176 = sbr.rel (%p174) target = $region28
        $region27: #{tpu_custom_call.1} parent=11 // pred_region
          _
        $region28: #{tpu_custom_call.1} parent=11 // pred_fallthru
          _
      $region12: #{tpu_custom_call.1} parent=5 // pred_fallthru
        _
      %p177 = scmp.lt.s32.totalorder %s14, 4
      // Predicated region
      $region29: #{tpu_custom_call.1} parent=5 // pred_check
        %p178 = pneg %p177
      $region30: #{tpu_custom_call.1} parent=5 // pred_check_branch
        %180 = sbr.rel (%p178) target = $region32
      $region31: #{tpu_custom_call.1} parent=5 // pred_region
        // Predicated region
        $region33: #{tpu_custom_call.1} parent=31 // pred_check
          %p181 = pneg %p34
        $region34: #{tpu_custom_call.1} parent=31 // pred_check_branch
          %183 = sbr.rel (%p181) target = $region36
        $region35: #{tpu_custom_call.1} parent=31 // pred_region
          %s184 = smul.u32 16, %s14
          %p185 = scmp.lt.s32.totalorder %s184, 63
          %s186 = scalar_select %p185, %s184, 63
          %s187 = smul.addr %s186, 8
          %s188 = scalar_lea.vmem %s0, %s187
          %s189 = smul.u32 16, %s14
        $region36: #{tpu_custom_call.1} parent=31 // pred_fallthru
          _
      $region32: #{tpu_custom_call.1} parent=5 // pred_fallthru
        _
      %p190 = scmp.le.s32.totalorder 1, %s14
      %p191 = scmp.lt.s32.totalorder %s14, 5
      %p192 = pnand %p190, %p191
      %p193 = pneg %p192
      // Predicated region
      $region37: #{tpu_custom_call.1} parent=5 // pred_check
        _
      $region38: #{tpu_custom_call.1} parent=5 // pred_check_branch
        %195 = sbr.rel (%p192) target = $region40
      $region39: #{tpu_custom_call.1} parent=5 // pred_region
        %s196 = ssub.s32 %s14, 1
        %s197 = smul.u32 16, %s19
        %p198 = scmp.lt.s32.totalorder %s197, 63
        %s199 = scalar_select %p198, %s197, 63
        %s200 = smul.addr %s199, 8
        %s201 = scalar_lea.vmem %s0, %s200
        %p202 = pneg %p40
        %p203 = pneg %p37
        %p204 = pneg %p61
        %p205 = pneg %p58
        %p206 = pneg %p82
        %p207 = pneg %p79
        %p208 = pneg %p103
        %p209 = pneg %p100
        %p210 = pneg %p124
        %p211 = pneg %p121
        %p212 = pneg %p150
        %p213 = pneg %p147
        %s214 = sand.u32 %s137, 1
        %s215 = scalar_lea.sflag [#allocation3], %s214
        %s216 = sand.u32 %s137, 1
        %s217 = smul.addr %s216, 2
        %s218 = scalar_lea.vmem [#allocation2], %s217
        %s219 = smul.u32 16, %s19
        %p220 = scmp.lt.s32.totalorder %s219, 63
        %s221 = scalar_select %p220, %s219, 63
        %s222 = smul.addr %s221, 8
        %s223 = scalar_lea.vmem %s0, %s222
        %s224 = smul.u32 16, %s19
        %v225 = vld [vmem:[%s223] sm:$0xff]
        %v226 = vld [vmem:[%s223 + $0x8] sm:$0xff]
        %v227 = vld [vmem:[%s223 + $0x10] sm:$0xff]
        %v228 = vld [vmem:[%s223 + $0x18] sm:$0xff]
        %v229 = vld [vmem:[%s223 + $0x20] sm:$0xff]
        %v230 = vld [vmem:[%s223 + $0x28] sm:$0xff]
        %v231 = vld [vmem:[%s223 + $0x30] sm:$0xff]
        %v232 = vld [vmem:[%s223 + $0x38] sm:$0xff]
        %v233 = vld [vmem:[%s223 + $0x40] sm:$0xff]
        %v234 = vld [vmem:[%s223 + $0x48] sm:$0xff]
        %v235 = vld [vmem:[%s223 + $0x50] sm:$0xff]
        %v236 = vld [vmem:[%s223 + $0x58] sm:$0xff]
        %v237 = vld [vmem:[%s223 + $0x60] sm:$0xff]
        %v238 = vld [vmem:[%s223 + $0x68] sm:$0xff]
        %v239 = vld [vmem:[%s223 + $0x70] sm:$0xff]
        %v240 = vld [vmem:[%s223 + $0x78] sm:$0xff]
        %v241 = vld [vmem:[%s1] sm:$0xff]
        %v242 = vld [vmem:[%s1 + $0x8] sm:$0xff]
        %v243 = vld [vmem:[%s2] sm:$0x1]
        %v245 = vlaneseq
        %v246 = vshrl.u32 %v245, 7
        %v247 = vsub.s32 0, %v246
        %v248 = vrot.slane %v243, %v247
        %vm250 = vcmask 130048
        %v252 = vsel %vm250, %v225, 0
        %v255 = vsel %vm250, %v226, 0
        %v258 = vsel %vm250, %v227, 0
        %v261 = vsel %vm250, %v228, 0
        %v264 = vsel %vm250, %v229, 0
        %v267 = vsel %vm250, %v230, 0
        %v270 = vsel %vm250, %v231, 0
        %v273 = vsel %vm250, %v232, 0
        %v276 = vsel %vm250, %v233, 0
        %v279 = vsel %vm250, %v234, 0
        %v282 = vsel %vm250, %v235, 0
        %v285 = vsel %vm250, %v236, 0
        %v288 = vsel %vm250, %v237, 0
        %v291 = vsel %vm250, %v238, 0
        %v294 = vsel %vm250, %v239, 0
        %v297 = vsel %vm250, %v240, 0
        %299 = vmatprep.subr.mxu0 0.0
        %300 = vmatpush1.msra.mxu0 0.0
        %301 = vmatprep.subr.mxu0 0.0
        %302 = vmatpush1.msra.mxu0 0.0
        %303 = vmatprep.subr.mxu0 0.0
        %304 = vmatpush1.msra.mxu0 0.0
        %305 = vmatprep.subr.mxu0 0.0
        %306 = vmatpush1.msra.mxu0 0.0
        %307 = vmatprep.subr.mxu0 0.0
        %308 = vmatpush1.msra.mxu0 0.0
        %309 = vmatprep.subr.mxu0 0.0
        %310 = vmatpush1.msra.mxu0 0.0
        %311 = vmatprep.subr.mxu0 0.0
        %312 = vmatpush1.msra.mxu0 0.0
        %313 = vmatprep.subr.mxu0 0.0
        %314 = vmatpush1.msra.mxu0 0.0
        %315 = vmatprep.subr.mxu0 0.0
        %316 = vmatpush1.msra.mxu0 0.0
        %317 = vmatprep.subr.mxu0 0.0
        %318 = vmatpush1.msra.mxu0 0.0
        %319 = vmatprep.subr.mxu0 0.0
        %320 = vmatpush1.msra.mxu0 0.0
        %321 = vmatprep.subr.mxu0 0.0
        %322 = vmatpush1.msra.mxu0 0.0
        %323 = vmatprep.subr.mxu0 0.0
        %324 = vmatpush1.msra.mxu0 0.0
        %325 = vmatprep.subr.mxu0 0.0
        %326 = vmatpush1.msra.mxu0 0.0
        %327 = vmatprep.subr.mxu0 0.0
        %328 = vmatpush1.msra.mxu0 %v242
        %329 = vmatprep.subr.mxu0 0.0
        %330 = vmatpush1.msra.mxu0 %v241
        %331 = vmatprep.subr.mxu0 0.0
        %332 = vmatpush2.msra.mxu0 0.0
        %333 = vmatprep.subr.mxu0 0.0
        %334 = vmatpush2.msra.mxu0 0.0
        %335 = vmatprep.subr.mxu0 0.0
        %336 = vmatpush2.msra.mxu0 0.0
        %337 = vmatprep.subr.mxu0 0.0
        %338 = vmatpush2.msra.mxu0 0.0
        %339 = vmatprep.subr.mxu0 0.0
        %340 = vmatpush2.msra.mxu0 0.0
        %341 = vmatprep.subr.mxu0 0.0
        %342 = vmatpush2.msra.mxu0 0.0
        %343 = vmatprep.subr.mxu0 0.0
        %344 = vmatpush2.msra.mxu0 0.0
        %345 = vmatprep.subr.mxu0 0.0
        %346 = vmatpush2.msra.mxu0 0.0
        %347 = vmatprep.subr.mxu0 0.0
        %348 = vmatpush2.msra.mxu0 0.0
        %349 = vmatprep.subr.mxu0 0.0
        %350 = vmatpush2.msra.mxu0 0.0
        %351 = vmatprep.subr.mxu0 0.0
        %352 = vmatpush2.msra.mxu0 0.0
        %353 = vmatprep.subr.mxu0 0.0
        %354 = vmatpush2.msra.mxu0 0.0
        %355 = vmatprep.subr.mxu0 0.0
        %356 = vmatpush2.msra.mxu0 0.0
        %357 = vmatprep.subr.mxu0 0.0
        %358 = vmatpush2.msra.mxu0 0.0
        %359 = vmatprep.subr.mxu0 0.0
        %360 = vmatpush2.msra.mxu0 0.0
        %361 = vmatprep.subr.mxu0 0.0
        %362 = vmatpush2.msra.mxu0 0.0
        %363 = vmatprep.mubr.f32.mxu0 0.0
        %364 = vmatmul.mubr.f32.gmra.mxu0 %v252
        %v365 = vpop.f32.mrf.mxu0
        %v366 = vadd.f32 %v248, %v365
        %v367 = vpop.f32.mrf.mxu0
        %368 = vmatprep.mubr.f32.mxu0 0.0
        %369 = vmatmul.mubr.f32.gmra.mxu0 %v255
        %v370 = vpop.f32.mrf.mxu0
        %v371 = vadd.f32 %v248, %v370
        %v372 = vpop.f32.mrf.mxu0
        %373 = vmatprep.mubr.f32.mxu0 0.0
        %374 = vmatmul.mubr.f32.gmra.mxu0 %v258
        %v375 = vpop.f32.mrf.mxu0
        %v376 = vadd.f32 %v248, %v375
        %v377 = vpop.f32.mrf.mxu0
        %378 = vmatprep.mubr.f32.mxu0 0.0
        %379 = vmatmul.mubr.f32.gmra.mxu0 %v261
        %v380 = vpop.f32.mrf.mxu0
        %v381 = vadd.f32 %v248, %v380
        %v382 = vpop.f32.mrf.mxu0
        %383 = vmatprep.mubr.f32.mxu0 0.0
        %384 = vmatmul.mubr.f32.gmra.mxu0 %v264
        %v385 = vpop.f32.mrf.mxu0
        %v386 = vadd.f32 %v248, %v385
        %v387 = vpop.f32.mrf.mxu0
        %388 = vmatprep.mubr.f32.mxu0 0.0
        %389 = vmatmul.mubr.f32.gmra.mxu0 %v267
        %v390 = vpop.f32.mrf.mxu0
        %v391 = vadd.f32 %v248, %v390
        %v392 = vpop.f32.mrf.mxu0
        %393 = vmatprep.mubr.f32.mxu0 0.0
        %394 = vmatmul.mubr.f32.gmra.mxu0 %v270
        %v395 = vpop.f32.mrf.mxu0
        %v396 = vadd.f32 %v248, %v395
        %v397 = vpop.f32.mrf.mxu0
        %398 = vmatprep.mubr.f32.mxu0 0.0
        %399 = vmatmul.mubr.f32.gmra.mxu0 %v273
        %v400 = vpop.f32.mrf.mxu0
        %v401 = vadd.f32 %v248, %v400
        %v402 = vpop.f32.mrf.mxu0
        %403 = vmatprep.mubr.f32.mxu0 0.0
        %404 = vmatmul.mubr.f32.gmra.mxu0 %v276
        %v405 = vpop.f32.mrf.mxu0
        %v406 = vadd.f32 %v248, %v405
        %v407 = vpop.f32.mrf.mxu0
        %408 = vmatprep.mubr.f32.mxu0 0.0
        %409 = vmatmul.mubr.f32.gmra.mxu0 %v279
        %v410 = vpop.f32.mrf.mxu0
        %v411 = vadd.f32 %v248, %v410
        %v412 = vpop.f32.mrf.mxu0
        %413 = vmatprep.mubr.f32.mxu0 0.0
        %414 = vmatmul.mubr.f32.gmra.mxu0 %v282
        %v415 = vpop.f32.mrf.mxu0
        %v416 = vadd.f32 %v248, %v415
        %v417 = vpop.f32.mrf.mxu0
        %418 = vmatprep.mubr.f32.mxu0 0.0
        %419 = vmatmul.mubr.f32.gmra.mxu0 %v285
        %v420 = vpop.f32.mrf.mxu0
        %v421 = vadd.f32 %v248, %v420
        %v422 = vpop.f32.mrf.mxu0
        %423 = vmatprep.mubr.f32.mxu0 0.0
        %424 = vmatmul.mubr.f32.gmra.mxu0 %v288
        %v425 = vpop.f32.mrf.mxu0
        %v426 = vadd.f32 %v248, %v425
        %v427 = vpop.f32.mrf.mxu0
        %428 = vmatprep.mubr.f32.mxu0 0.0
        %429 = vmatmul.mubr.f32.gmra.mxu0 %v291
        %v430 = vpop.f32.mrf.mxu0
        %v431 = vadd.f32 %v248, %v430
        %v432 = vpop.f32.mrf.mxu0
        %433 = vmatprep.mubr.f32.mxu0 0.0
        %434 = vmatmul.mubr.f32.gmra.mxu0 %v294
        %v435 = vpop.f32.mrf.mxu0
        %v436 = vadd.f32 %v248, %v435
        %v437 = vpop.f32.mrf.mxu0
        %438 = vmatprep.mubr.f32.mxu0 0.0
        %439 = vmatmul.mubr.f32.gmra.mxu0 %v297
        %v440 = vpop.f32.mrf.mxu0
        %v441 = vadd.f32 %v248, %v440
        %v442 = vpop.f32.mrf.mxu0
        %443 = vdwg.mxu0
        %vm444 = vcmp.gt.f32.partialorder %v366, 0.0
        %vm445 = vcmp.gt.f32.partialorder %v371, 0.0
        %vm446 = vcmp.gt.f32.partialorder %v376, 0.0
        %vm447 = vcmp.gt.f32.partialorder %v381, 0.0
        %vm448 = vcmp.gt.f32.partialorder %v386, 0.0
        %vm449 = vcmp.gt.f32.partialorder %v391, 0.0
        %vm450 = vcmp.gt.f32.partialorder %v396, 0.0
        %vm451 = vcmp.gt.f32.partialorder %v401, 0.0
        %vm452 = vcmp.gt.f32.partialorder %v406, 0.0
        %vm453 = vcmp.gt.f32.partialorder %v411, 0.0
        %vm454 = vcmp.gt.f32.partialorder %v416, 0.0
        %vm455 = vcmp.gt.f32.partialorder %v421, 0.0
        %vm456 = vcmp.gt.f32.partialorder %v426, 0.0
        %vm457 = vcmp.gt.f32.partialorder %v431, 0.0
        %vm458 = vcmp.gt.f32.partialorder %v436, 0.0
        %vm459 = vcmp.gt.f32.partialorder %v441, 0.0
        %v460 = vmin.f32 %v366, 0.0
        %v461 = vmin.f32 %v371, 0.0
        %v462 = vmin.f32 %v376, 0.0
        %v463 = vmin.f32 %v381, 0.0
        %v464 = vmin.f32 %v386, 0.0
        %v465 = vmin.f32 %v391, 0.0
        %v466 = vmin.f32 %v396, 0.0
        %v467 = vmin.f32 %v401, 0.0
        %v468 = vmin.f32 %v406, 0.0
        %v469 = vmin.f32 %v411, 0.0
        %v470 = vmin.f32 %v416, 0.0
        %v471 = vmin.f32 %v421, 0.0
        %v472 = vmin.f32 %v426, 0.0
        %v473 = vmin.f32 %v431, 0.0
        %v474 = vmin.f32 %v436, 0.0
        %v475 = vmin.f32 %v441, 0.0
        %v476 = vmul.f32 %v460, 1.442695
        %v477 = vpow.pop %v476
        %v478 = vmul.f32 %v461, 1.442695
        %v479 = vpow.pop %v478
        %v480 = vmul.f32 %v462, 1.442695
        %v481 = vpow.pop %v480
        %v482 = vmul.f32 %v463, 1.442695
        %v483 = vpow.pop %v482
        %v484 = vmul.f32 %v464, 1.442695
        %v485 = vpow.pop %v484
        %v486 = vmul.f32 %v465, 1.442695
        %v487 = vpow.pop %v486
        %v488 = vmul.f32 %v466, 1.442695
        %v489 = vpow.pop %v488
        %v490 = vmul.f32 %v467, 1.442695
        %v491 = vpow.pop %v490
        %v492 = vmul.f32 %v468, 1.442695
        %v493 = vpow.pop %v492
        %v494 = vmul.f32 %v469, 1.442695
        %v495 = vpow.pop %v494
        %v496 = vmul.f32 %v470, 1.442695
        %v497 = vpow.pop %v496
        %v498 = vmul.f32 %v471, 1.442695
        %v499 = vpow.pop %v498
        %v500 = vmul.f32 %v472, 1.442695
        %v501 = vpow.pop %v500
        %v502 = vmul.f32 %v473, 1.442695
        %v503 = vpow.pop %v502
        %v504 = vmul.f32 %v474, 1.442695
        %v505 = vpow.pop %v504
        %v506 = vmul.f32 %v475, 1.442695
        %v507 = vpow.pop %v506
        %v508 = vsub.f32 %v477, 1.0
        %v509 = vsub.f32 %v479, 1.0
        %v510 = vsub.f32 %v481, 1.0
        %v511 = vsub.f32 %v483, 1.0
        %v512 = vsub.f32 %v485, 1.0
        %v513 = vsub.f32 %v487, 1.0
        %v514 = vsub.f32 %v489, 1.0
        %v515 = vsub.f32 %v491, 1.0
        %v516 = vsub.f32 %v493, 1.0
        %v517 = vsub.f32 %v495, 1.0
        %v518 = vsub.f32 %v497, 1.0
        %v519 = vsub.f32 %v499, 1.0
        %v520 = vsub.f32 %v501, 1.0
        %v521 = vsub.f32 %v503, 1.0
        %v522 = vsub.f32 %v505, 1.0
        %v523 = vsub.f32 %v507, 1.0
        %v524 = vsel %vm444, %v366, %v508
        %v525 = vsel %vm445, %v371, %v509
        %v526 = vsel %vm446, %v376, %v510
        %v527 = vsel %vm447, %v381, %v511
        %v528 = vsel %vm448, %v386, %v512
        %v529 = vsel %vm449, %v391, %v513
        %v530 = vsel %vm450, %v396, %v514
        %v531 = vsel %vm451, %v401, %v515
        %v532 = vsel %vm452, %v406, %v516
        %v533 = vsel %vm453, %v411, %v517
        %v534 = vsel %vm454, %v416, %v518
        %v535 = vsel %vm455, %v421, %v519
        %v536 = vsel %vm456, %v426, %v520
        %v537 = vsel %vm457, %v431, %v521
        %v538 = vsel %vm458, %v436, %v522
        %v539 = vsel %vm459, %v441, %v523
        %v540 = vld [vmem:[%s3] sm:$0x3]
        %v541 = vld [vmem:[%s4] sm:$0x3]
        %543 = vset.pattern.permute.xlu0 0
        %544 = vperm.xlu0 %543, %v541
        %v545 = vpop.permute.xlu0 %544
        %vm547 = vcmask 261120
        %v549 = vsel %vm547, %v540, 0
        %v552 = vsel %vm547, %v524, 0
        %v555 = vsel %vm547, %v525, 0
        %v558 = vsel %vm547, %v526, 0
        %v561 = vsel %vm547, %v527, 0
        %v564 = vsel %vm547, %v528, 0
        %v567 = vsel %vm547, %v529, 0
        %v570 = vsel %vm547, %v530, 0
        %v573 = vsel %vm547, %v531, 0
        %v576 = vsel %vm547, %v532, 0
        %v579 = vsel %vm547, %v533, 0
        %v582 = vsel %vm547, %v534, 0
        %v585 = vsel %vm547, %v535, 0
        %v588 = vsel %vm547, %v536, 0
        %v591 = vsel %vm547, %v537, 0
        %v594 = vsel %vm547, %v538, 0
        %v597 = vsel %vm547, %v539, 0
        %599 = vmatprep.subr.mxu0 0.0
        %600 = vmatpush1.xpose.msra.mxu0 %v597
        %601 = vmatprep.subr.mxu0 0.0
        %602 = vmatpush1.xpose.msra.mxu0 %v594
        %603 = vmatprep.subr.mxu0 0.0
        %604 = vmatpush1.xpose.msra.mxu0 %v591
        %605 = vmatprep.subr.mxu0 0.0
        %606 = vmatpush1.xpose.msra.mxu0 %v588
        %607 = vmatprep.subr.mxu0 0.0
        %608 = vmatpush1.xpose.msra.mxu0 %v585
        %609 = vmatprep.subr.mxu0 0.0
        %610 = vmatpush1.xpose.msra.mxu0 %v582
        %611 = vmatprep.subr.mxu0 0.0
        %612 = vmatpush1.xpose.msra.mxu0 %v579
        %613 = vmatprep.subr.mxu0 0.0
        %614 = vmatpush1.xpose.msra.mxu0 %v576
        %615 = vmatprep.subr.mxu0 0.0
        %616 = vmatpush1.xpose.msra.mxu0 %v573
        %617 = vmatprep.subr.mxu0 0.0
        %618 = vmatpush1.xpose.msra.mxu0 %v570
        %619 = vmatprep.subr.mxu0 0.0
        %620 = vmatpush1.xpose.msra.mxu0 %v567
        %621 = vmatprep.subr.mxu0 0.0
        %622 = vmatpush1.xpose.msra.mxu0 %v564
        %623 = vmatprep.subr.mxu0 0.0
        %624 = vmatpush1.xpose.msra.mxu0 %v561
        %625 = vmatprep.subr.mxu0 0.0
        %626 = vmatpush1.xpose.msra.mxu0 %v558
        %627 = vmatprep.subr.mxu0 0.0
        %628 = vmatpush1.xpose.msra.mxu0 %v555
        %629 = vmatprep.subr.mxu0 0.0
        %630 = vmatpush1.xpose.msra.mxu0 %v552
        %631 = vmatprep.subr.mxu0 0.0
        %632 = vmatpush2.xpose.msra.mxu0 0.0
        %633 = vmatprep.subr.mxu0 0.0
        %634 = vmatpush2.xpose.msra.mxu0 0.0
        %635 = vmatprep.subr.mxu0 0.0
        %636 = vmatpush2.xpose.msra.mxu0 0.0
        %637 = vmatprep.subr.mxu0 0.0
        %638 = vmatpush2.xpose.msra.mxu0 0.0
        %639 = vmatprep.subr.mxu0 0.0
        %640 = vmatpush2.xpose.msra.mxu0 0.0
        %641 = vmatprep.subr.mxu0 0.0
        %642 = vmatpush2.xpose.msra.mxu0 0.0
        %643 = vmatprep.subr.mxu0 0.0
        %644 = vmatpush2.xpose.msra.mxu0 0.0
        %645 = vmatprep.subr.mxu0 0.0
        %646 = vmatpush2.xpose.msra.mxu0 0.0
        %647 = vmatprep.subr.mxu0 0.0
        %648 = vmatpush2.xpose.msra.mxu0 0.0
        %649 = vmatprep.subr.mxu0 0.0
        %650 = vmatpush2.xpose.msra.mxu0 0.0
        %651 = vmatprep.subr.mxu0 0.0
        %652 = vmatpush2.xpose.msra.mxu0 0.0
        %653 = vmatprep.subr.mxu0 0.0
        %654 = vmatpush2.xpose.msra.mxu0 0.0
        %655 = vmatprep.subr.mxu0 0.0
        %656 = vmatpush2.xpose.msra.mxu0 0.0
        %657 = vmatprep.subr.mxu0 0.0
        %658 = vmatpush2.xpose.msra.mxu0 0.0
        %659 = vmatprep.subr.mxu0 0.0
        %660 = vmatpush2.xpose.msra.mxu0 0.0
        %661 = vmatprep.subr.mxu0 0.0
        %662 = vmatpush2.xpose.msra.mxu0 0.0
        %663 = vmatprep.mubr.f32.mxu0 0.0
        %664 = vmatmul.mubr.f32.gmra.mxu0 %v549
        %v665 = vpop.f32.mrf.mxu0
        %v666 = vadd.f32 %v545, %v665
        %v667 = vpop.f32.mrf.mxu0
        %668 = vdwg.mxu0
        %v669 = vlaneseq
        %v670 = vshrl.u32 %v669, 7
        %v671 = vmax.f32 %v666, -1000000.0
        %v672 = vmin.f32 %v671, 1000000.0
        %vm673 = vcmp.gt.f32.partialorder %v666, 20.0
        %v674 = vmin.f32 %v666, 20.0
        %v675 = vmul.f32 %v674, 1.442695
        %v676 = vpow.pop %v675
        %v677 = vadd.f32 %v676, 1.0
        %v678 = vlog2.pop %v677
        %v679 = vmul.f32 %v678, 0.6931472
        %v680 = vmul.f32 -0.5, %v676
        %v681 = vadd.f32 %v680, 1.0
        %v682 = vmul.f32 %v681, %v676
        %v683 = vand.u32 2147483647, %v676
        %vm684 = vcmp.lt.f32.partialorder %v683, 0.0004427343
        %v685 = vsel %vm684, %v682, %v679
        %v686 = vsel %vm673, %v666, %v685
        %v687 = vmax.f32 %v686, 0.001
        %v688 = vmin.f32 %v687, 1000000.0
        %vm689 = vcmp.eq.s32.totalorder %v670, 0
        %v690 = vsel %vm689, %v672, %v688
        %691 = vst [vmem:[%s218] sm:$0x3] %v690
        %s692 = sand.u32 %s137, 1
        %s693 = scalar_lea.sflag [#allocation3], %s692
        %s694 = sand.u32 %s137, 1
        %s695 = smul.addr %s694, 2
        %s696 = scalar_lea.vmem [#allocation2], %s695
        // Predicated region
        $region41: #{tpu_custom_call.1} parent=39 // pred_check
          %p697 = pneg %p147
        $region42: #{tpu_custom_call.1} parent=39 // pred_check_branch
          %699 = sbr.rel (%p697) target = $region44
        $region43: #{tpu_custom_call.1} parent=39 // pred_region
          %s701 = ssub.s32 32, 32
          %702 = vsyncadd %s693, %s701
          %s703 = smul.addr %s19, 32
          %s704 = scalar_lea.hbm %s5, %s703
          %s706 = sshll.u32 %s696, 4
          %s707 = int_to_ptr.vmem [resolvable:$true] %s706
          %709 = dma.vmem_to_hbm [thread:$0]  %s707, 32, %s704, %s693
        $region44: #{tpu_custom_call.1} parent=39 // pred_fallthru
          _
      $region40: #{tpu_custom_call.1} parent=5 // pred_fallthru
        _
      %p710 = scmp.le.s32.totalorder 2, %s14
      // Predicated region
      $region45: #{tpu_custom_call.1} parent=5 // pred_check
        %p711 = pneg %p710
      $region46: #{tpu_custom_call.1} parent=5 // pred_check_branch
        %713 = sbr.rel (%p711) target = $region48
      $region47: #{tpu_custom_call.1} parent=5 // pred_region
        %s714 = ssub.s32 %s14, 2
        // Predicated region
        $region49: #{tpu_custom_call.1} parent=47 // pred_check
          %p715 = pneg %p153
        $region50: #{tpu_custom_call.1} parent=47 // pred_check_branch
          %717 = sbr.rel (%p715) target = $region52
        $region51: #{tpu_custom_call.1} parent=47 // pred_region
          %s718 = sand.u32 %s138, 1
          %s719 = scalar_lea.sflag [#allocation3], %s718
          %s720 = sand.u32 %s138, 1
          %s721 = smul.addr %s720, 2
          %s722 = scalar_lea.vmem [#allocation2], %s721
          %723 = dma.done %s719, 32
        $region52: #{tpu_custom_call.1} parent=47 // pred_fallthru
          _
      $region48: #{tpu_custom_call.1} parent=5 // pred_fallthru
        _
    $region6: #{tpu_custom_call.1} parent=1 // loop_footer
      %s18 = sadd.s32 1, %s14
    $region7: #{tpu_custom_call.1} parent=1 // loop_footer_branch
      %13 = sbr.rel target = $region3
    $region8: #{tpu_custom_call.1} parent=1 // loop_exit
      _
    %724 = vsyncpa [#allocation3], 1
    %s725 = scalar_lea.sflag [#allocation3], 1
    %726 = vsyncpa %s725, 1

</llo_original>
